<compile_context>
chip_gen: v5e
topology: v5e:2x2
jax: 0.10.0
libtpu: 0.0.40
codegen_flags: <defaults>
</compile_context>

<pallas_src>
import jax
import jax.numpy as jnp
import numpy as np
from jax.experimental import pallas as pl
from jax.experimental.pallas import tpu as pltpu


def _round_up(n, m):
    return ((n + m - 1) // m) * m


def _leaky_relu(h, slope=0.2):
    return jnp.where(h > 0, h, slope * h)


def discriminator_kernel(x_ref,
                         w1_ref, b1_ref,
                         w2_ref, b2_ref,
                         w3_ref, b3_ref,
                         w4r_ref, b4_ref,
                         o_ref):
    # One batch tile end-to-end: 3 MXU matmuls (bf16 inputs, f32 accumulation),
    # VPU bias/LeakyReLU in f32, then a VPU-mul + lane-reduce final layer and a
    # sigmoid over the single output column.
    x = x_ref[...].astype(jnp.bfloat16)  # in-register cast; x arrives f32 from HBM

    h = jnp.dot(x, w1_ref[...], preferred_element_type=jnp.float32) + b1_ref[...]
    h = _leaky_relu(h)
    # TODO(synk): Dropout(0.3) is identity (eval mode); training-mode parity would
    # need a pltpu.prng_* Bernoulli mask with 1/(1-p) rescale.

    h = jnp.dot(h.astype(jnp.bfloat16), w2_ref[...],
                preferred_element_type=jnp.float32) + b2_ref[...]
    h = _leaky_relu(h)

    h = jnp.dot(h.astype(jnp.bfloat16), w3_ref[...],
                preferred_element_type=jnp.float32) + b3_ref[...]
    h = _leaky_relu(h)

    # Final Linear(H3, 1): elementwise multiply against the [1, H3] weight row,
    # reduce across lanes, add the scalar bias, sigmoid only on the [tile_b, 1]
    # column.  Store is the packed narrow output block.
    logit = jnp.sum(h * w4r_ref[...], axis=-1, keepdims=True) + b4_ref[...]
    o_ref[...] = jax.nn.sigmoid(logit)


def prepare_params(params):
    """One-time conversion of f32 Linear params into the kernel's resident layout.

    Hoisted out of the forward pass so the per-call weight cast/pad HBM passes
    disappear: hidden weights bf16 [in, out], biases f32 [1, out], final
    Linear(H3, 1) stored as an f32 row w4r [1, H3] plus scalar bias b4 [1, 1].
    """
    return {
        "w1": params["w1"].astype(jnp.bfloat16),
        "b1": params["b1"].astype(jnp.float32),
        "w2": params["w2"].astype(jnp.bfloat16),
        "b2": params["b2"].astype(jnp.float32),
        "w3": params["w3"].astype(jnp.bfloat16),
        "b3": params["b3"].astype(jnp.float32),
        "w4r": params["w4"].astype(jnp.float32).reshape(1, -1),   # [H3,1] -> [1,H3]
        "b4": params["b4"].astype(jnp.float32).reshape(1, 1),
    }


def discriminator_forward(x, prep, *, tile_b=None):
    """x: [B, D] float32.  prep: output of prepare_params().  Returns [B, 1] float32."""
    B, D = x.shape
    w1, b1 = prep["w1"], prep["b1"]
    w2, b2 = prep["w2"], prep["b2"]
    w3, b3 = prep["w3"], prep["b3"]
    w4r, b4 = prep["w4r"], prep["b4"]
    H1, H2, H3 = w1.shape[1], w2.shape[1], w3.shape[1]

    # Batch tile: tiny batches run in one grid step; larger batches get >= 2 grid
    # steps so v7x's two TensorCores both get work, capped at 1024 rows so
    # per-tile activations stay a few MiB of VMEM (sweepable via tile_b= on v6e).
    # The narrow (tile_b, 1) output block only requires tile_b % 8 == 0.
    if tile_b is None:
        if B <= 64:
            tile_b = _round_up(B, 8)
        else:
            tile_b = min(1024, _round_up((B + 1) // 2, 8))
    tile_b = max(8, _round_up(min(tile_b, _round_up(B, 8)), 8))

    B_pad = _round_up(B, tile_b)
    if B_pad != B:
        x = jnp.pad(x, ((0, B_pad - B), (0, 0)))

    # Grid over the batch only; weights use a constant index_map so they stay
    # resident in VMEM (same block every step -> no re-DMA).
    full = lambda i: (0, 0)
    grid_spec = pltpu.PrefetchScalarGridSpec(
        num_scalar_prefetch=0,
        grid=(B_pad // tile_b,),
        in_specs=[
            pl.BlockSpec((tile_b, D), lambda i: (i, 0)),            # x tile (f32)
            pl.BlockSpec((D, H1), full), pl.BlockSpec((1, H1), full),
            pl.BlockSpec((H1, H2), full), pl.BlockSpec((1, H2), full),
            pl.BlockSpec((H2, H3), full), pl.BlockSpec((1, H3), full),
            pl.BlockSpec((1, H3), full), pl.BlockSpec((1, 1), full),
        ],
        out_specs=pl.BlockSpec((tile_b, 1), lambda i: (i, 0)),
    )

    flops = 2 * B_pad * (D * H1 + H1 * H2 + H2 * H3 + H3)
    bytes_accessed = (B_pad * D * 4                         # x (f32, read once)
                      + 2 * (D * H1 + H1 * H2 + H2 * H3)    # bf16 hidden weights
                      + 4 * (H1 + H2 + H3 + H3 + 1)         # f32 biases + w4 row
                      + B_pad * 4)                          # packed [B,1] output
    cost = pl.CostEstimate(flops=flops, transcendentals=B_pad,
                           bytes_accessed=bytes_accessed)

    out = pl.pallas_call(
        discriminator_kernel,
        out_shape=jax.ShapeDtypeStruct((B_pad, 1), jnp.float32),
        grid_spec=grid_spec,
        compiler_params=pltpu.CompilerParams(
            dimension_semantics=("parallel",),
            vmem_limit_bytes=32 * 1024 * 1024),
        cost_estimate=cost,
    )(x, w1, b1, w2, b2, w3, b3, w4r, b4)

    if B_pad != B:
        out = out[:B]
    return out


def init_params(key, input_dim, hidden_dims=(512, 256, 128)):
    """Deterministic init mimicking nn.Linear default (uniform(+/- 1/sqrt(fan_in)))."""
    dims = [input_dim] + list(hidden_dims) + [1]
    params = {}
    for li, (fan_in, fan_out) in enumerate(zip(dims[:-1], dims[1:]), start=1):
        key, kw, kb = jax.random.split(key, 3)
        bound = 1.0 / np.sqrt(fan_in)
        params[f"w{li}"] = jax.random.uniform(
            kw, (fan_in, fan_out), jnp.float32, -bound, bound)
        params[f"b{li}"] = jax.random.uniform(
            kb, (1, fan_out), jnp.float32, -bound, bound)
    return params


def reference_forward(x, params):
    """Pure-JAX reference mirroring the kernel numerics: bf16 inputs / f32 accumulation
    for the hidden matmuls, final layer fully in f32."""
    h = x
    for li in range(1, 4):
        h = jnp.dot(h.astype(jnp.bfloat16), params[f"w{li}"].astype(jnp.bfloat16),
                    preferred_element_type=jnp.float32) + params[f"b{li}"]
        h = jnp.where(h > 0, h, 0.2 * h)
    logit = jnp.dot(h, params["w4"].astype(jnp.float32),
                    preferred_element_type=jnp.float32) + params["b4"]
    return jax.nn.sigmoid(logit)


if __name__ == "__main__":
    key = jax.random.PRNGKey(0)
    key, kx = jax.random.split(key)

    B, D = 16, 32
    x = jax.random.normal(kx, (B, D), jnp.float32)
    params = init_params(key, D)
    prep = prepare_params(params)   # one-time weight cast / layout (hoisted out of forward)

    out = jax.block_until_ready(discriminator_forward(x, prep))
    ref = jax.block_until_ready(reference_forward(x, params))

    assert out.shape == (B, 1)
    np.testing.assert_allclose(np.asarray(out), np.asarray(ref),
                               rtol=2e-3, atol=2e-3)
    print("KERNEL_OK")
</pallas_src>

<mosaic_0001>
module attributes {stable_mosaic.version = 11 : i64} {
  func.func @discriminator_kernel(%arg0: i32, %arg1: memref<16x32xf32, #tpu.memory_space<vmem>>, %arg2: memref<32x512xbf16, #tpu.memory_space<vmem>>, %arg3: memref<1x512xf32, #tpu.memory_space<vmem>>, %arg4: memref<512x256xbf16, #tpu.memory_space<vmem>>, %arg5: memref<1x256xf32, #tpu.memory_space<vmem>>, %arg6: memref<256x128xbf16, #tpu.memory_space<vmem>>, %arg7: memref<1x128xf32, #tpu.memory_space<vmem>>, %arg8: memref<1x128xf32, #tpu.memory_space<vmem>>, %arg9: memref<1x1xf32, #tpu.memory_space<vmem>>, %arg10: memref<16x1xf32, #tpu.memory_space<vmem>>) attributes {dimension_semantics = [#tpu.dimension_semantics<parallel>], iteration_bounds = array<i64: 1>, scalar_prefetch = 0 : i64, scratch_operands = 0 : i64, tpu.core_type = #tpu.core_type<tc>, window_params = [{transform_indices = @transform_0, window_bounds = array<i64: 16, 32>}, {pipeline_mode = #tpu.pipeline_mode<synchronous>, transform_indices = @transform_1, window_bounds = array<i64: 32, 512>}, {pipeline_mode = #tpu.pipeline_mode<synchronous>, transform_indices = @transform_2, window_bounds = array<i64: 1, 512>}, {pipeline_mode = #tpu.pipeline_mode<synchronous>, transform_indices = @transform_3, window_bounds = array<i64: 512, 256>}, {pipeline_mode = #tpu.pipeline_mode<synchronous>, transform_indices = @transform_4, window_bounds = array<i64: 1, 256>}, {pipeline_mode = #tpu.pipeline_mode<synchronous>, transform_indices = @transform_5, window_bounds = array<i64: 256, 128>}, {pipeline_mode = #tpu.pipeline_mode<synchronous>, transform_indices = @transform_6, window_bounds = array<i64: 1, 128>}, {pipeline_mode = #tpu.pipeline_mode<synchronous>, transform_indices = @transform_7, window_bounds = array<i64: 1, 128>}, {pipeline_mode = #tpu.pipeline_mode<synchronous>, transform_indices = @transform_8, window_bounds = array<i64: 1, 1>}, {transform_indices = @transform_9, window_bounds = array<i64: 16, 1>}]} {
    %c0 = arith.constant 0 : index
    %c0_0 = arith.constant 0 : index
    %0 = vector.load %arg1[%c0, %c0_0] : memref<16x32xf32, #tpu.memory_space<vmem>>, vector<16x32xf32>
    %1 = arith.truncf %0 : vector<16x32xf32> to vector<16x32xbf16>
    %c0_1 = arith.constant 0 : index
    %c0_2 = arith.constant 0 : index
    %2 = vector.load %arg2[%c0_1, %c0_2] : memref<32x512xbf16, #tpu.memory_space<vmem>>, vector<32x512xbf16>
    %cst = arith.constant dense<0.000000e+00> : vector<16x512xf32>
    %3 = tpu.matmul %1, %2, %cst {dimension_numbers = #tpu.dot_dimension_numbers<[1], [0], [0], [1], [0, 0, 1, 1], [], []>} : vector<16x32xbf16>, vector<32x512xbf16>, vector<16x512xf32> -> vector<16x512xf32>
    %c0_3 = arith.constant 0 : index
    %c0_4 = arith.constant 0 : index
    %4 = vector.load %arg3[%c0_3, %c0_4] : memref<1x512xf32, #tpu.memory_space<vmem>>, vector<1x512xf32>
    %5 = vector.broadcast %4 : vector<1x512xf32> to vector<16x512xf32>
    %6 = arith.addf %3, %5 : vector<16x512xf32>
    %cst_5 = arith.constant 0.000000e+00 : f32
    %7 = vector.broadcast %cst_5 : f32 to vector<16x512xf32>
    %8 = arith.cmpf ogt, %6, %7 : vector<16x512xf32>
    %cst_6 = arith.constant 2.000000e-01 : f32
    %9 = vector.broadcast %cst_6 : f32 to vector<16x512xf32>
    %10 = arith.mulf %9, %6 : vector<16x512xf32>
    %11 = arith.select %8, %6, %10 : vector<16x512xi1>, vector<16x512xf32>
    %12 = arith.truncf %11 : vector<16x512xf32> to vector<16x512xbf16>
    %c0_7 = arith.constant 0 : index
    %c0_8 = arith.constant 0 : index
    %13 = vector.load %arg4[%c0_7, %c0_8] : memref<512x256xbf16, #tpu.memory_space<vmem>>, vector<512x256xbf16>
    %cst_9 = arith.constant dense<0.000000e+00> : vector<16x256xf32>
    %14 = tpu.matmul %12, %13, %cst_9 {dimension_numbers = #tpu.dot_dimension_numbers<[1], [0], [0], [1], [0, 0, 1, 1], [], []>} : vector<16x512xbf16>, vector<512x256xbf16>, vector<16x256xf32> -> vector<16x256xf32>
    %c0_10 = arith.constant 0 : index
    %c0_11 = arith.constant 0 : index
    %15 = vector.load %arg5[%c0_10, %c0_11] : memref<1x256xf32, #tpu.memory_space<vmem>>, vector<1x256xf32>
    %16 = vector.broadcast %15 : vector<1x256xf32> to vector<16x256xf32>
    %17 = arith.addf %14, %16 : vector<16x256xf32>
    %cst_12 = arith.constant 0.000000e+00 : f32
    %18 = vector.broadcast %cst_12 : f32 to vector<16x256xf32>
    %19 = arith.cmpf ogt, %17, %18 : vector<16x256xf32>
    %cst_13 = arith.constant 2.000000e-01 : f32
    %20 = vector.broadcast %cst_13 : f32 to vector<16x256xf32>
    %21 = arith.mulf %20, %17 : vector<16x256xf32>
    %22 = arith.select %19, %17, %21 : vector<16x256xi1>, vector<16x256xf32>
    %23 = arith.truncf %22 : vector<16x256xf32> to vector<16x256xbf16>
    %c0_14 = arith.constant 0 : index
    %c0_15 = arith.constant 0 : index
    %24 = vector.load %arg6[%c0_14, %c0_15] : memref<256x128xbf16, #tpu.memory_space<vmem>>, vector<256x128xbf16>
    %cst_16 = arith.constant dense<0.000000e+00> : vector<16x128xf32>
    %25 = tpu.matmul %23, %24, %cst_16 {dimension_numbers = #tpu.dot_dimension_numbers<[1], [0], [0], [1], [0, 0, 1, 1], [], []>} : vector<16x256xbf16>, vector<256x128xbf16>, vector<16x128xf32> -> vector<16x128xf32>
    %c0_17 = arith.constant 0 : index
    %c0_18 = arith.constant 0 : index
    %26 = vector.load %arg7[%c0_17, %c0_18] : memref<1x128xf32, #tpu.memory_space<vmem>>, vector<1x128xf32>
    %27 = vector.broadcast %26 : vector<1x128xf32> to vector<16x128xf32>
    %28 = arith.addf %25, %27 : vector<16x128xf32>
    %cst_19 = arith.constant 0.000000e+00 : f32
    %29 = vector.broadcast %cst_19 : f32 to vector<16x128xf32>
    %30 = arith.cmpf ogt, %28, %29 : vector<16x128xf32>
    %cst_20 = arith.constant 2.000000e-01 : f32
    %31 = vector.broadcast %cst_20 : f32 to vector<16x128xf32>
    %32 = arith.mulf %31, %28 : vector<16x128xf32>
    %33 = arith.select %30, %28, %32 : vector<16x128xi1>, vector<16x128xf32>
    %c0_21 = arith.constant 0 : index
    %c0_22 = arith.constant 0 : index
    %34 = vector.load %arg8[%c0_21, %c0_22] : memref<1x128xf32, #tpu.memory_space<vmem>>, vector<1x128xf32>
    %35 = vector.broadcast %34 : vector<1x128xf32> to vector<16x128xf32>
    %36 = arith.mulf %33, %35 : vector<16x128xf32>
    %cst_23 = arith.constant dense<0.000000e+00> : vector<16xf32>
    %37 = vector.multi_reduction <add>, %36, %cst_23 [1] : vector<16x128xf32> to vector<16xf32>
    %38 = vector.shape_cast %37 : vector<16xf32> to vector<16x1xf32>
    %c0_24 = arith.constant 0 : index
    %c0_25 = arith.constant 0 : index
    %39 = vector.load %arg9[%c0_24, %c0_25] : memref<1x1xf32, #tpu.memory_space<vmem>>, vector<1x1xf32>
    %40 = vector.broadcast %39 : vector<1x1xf32> to vector<16x1xf32>
    %41 = arith.addf %38, %40 : vector<16x1xf32>
    %42 = arith.negf %41 : vector<16x1xf32>
    %43 = math.exp %42 : vector<16x1xf32>
    %cst_26 = arith.constant 1.000000e+00 : f32
    %44 = vector.broadcast %cst_26 : f32 to vector<16x1xf32>
    %45 = arith.addf %44, %43 : vector<16x1xf32>
    %46 = arith.divf %44, %45 : vector<16x1xf32>
    %c0_27 = arith.constant 0 : index
    %c0_28 = arith.constant 0 : index
    %47 = vector.load %arg10[%c0_27, %c0_28] : memref<16x1xf32, #tpu.memory_space<vmem>>, vector<16x1xf32>
    tpu.vector_store %arg10[%c0_27, %c0_28], %46 {strides = array<i32>} : memref<16x1xf32, #tpu.memory_space<vmem>>, vector<16x1xf32>,
    return
  }
  func.func @transform_0(%arg0: i32) -> (i32, i32) {
    %c0_i32 = arith.constant 0 : i32
    %c0_i32_0 = arith.constant 0 : i32
    return %arg0, %c0_i32 : i32, i32
  }
  func.func @transform_1(%arg0: i32) -> (i32, i32) {
    %c0_i32 = arith.constant 0 : i32
    %c0_i32_0 = arith.constant 0 : i32
    %c0_i32_1 = arith.constant 0 : i32
    return %c0_i32, %c0_i32_0 : i32, i32
  }
  func.func @transform_2(%arg0: i32) -> (i32, i32) {
    %c0_i32 = arith.constant 0 : i32
    %c0_i32_0 = arith.constant 0 : i32
    %c0_i32_1 = arith.constant 0 : i32
    return %c0_i32, %c0_i32_0 : i32, i32
  }
  func.func @transform_3(%arg0: i32) -> (i32, i32) {
    %c0_i32 = arith.constant 0 : i32
    %c0_i32_0 = arith.constant 0 : i32
    %c0_i32_1 = arith.constant 0 : i32
    return %c0_i32, %c0_i32_0 : i32, i32
  }
  func.func @transform_4(%arg0: i32) -> (i32, i32) {
    %c0_i32 = arith.constant 0 : i32
    %c0_i32_0 = arith.constant 0 : i32
    %c0_i32_1 = arith.constant 0 : i32
    return %c0_i32, %c0_i32_0 : i32, i32
  }
  func.func @transform_5(%arg0: i32) -> (i32, i32) {
    %c0_i32 = arith.constant 0 : i32
    %c0_i32_0 = arith.constant 0 : i32
    %c0_i32_1 = arith.constant 0 : i32
    return %c0_i32, %c0_i32_0 : i32, i32
  }
  func.func @transform_6(%arg0: i32) -> (i32, i32) {
    %c0_i32 = arith.constant 0 : i32
    %c0_i32_0 = arith.constant 0 : i32
    %c0_i32_1 = arith.constant 0 : i32
    return %c0_i32, %c0_i32_0 : i32, i32
  }
  func.func @transform_7(%arg0: i32) -> (i32, i32) {
    %c0_i32 = arith.constant 0 : i32
    %c0_i32_0 = arith.constant 0 : i32
    %c0_i32_1 = arith.constant 0 : i32
    return %c0_i32, %c0_i32_0 : i32, i32
  }
  func.func @transform_8(%arg0: i32) -> (i32, i32) {
    %c0_i32 = arith.constant 0 : i32
    %c0_i32_0 = arith.constant 0 : i32
    %c0_i32_1 = arith.constant 0 : i32
    return %c0_i32, %c0_i32_0 : i32, i32
  }
  func.func @transform_9(%arg0: i32) -> (i32, i32) {
    %c0_i32 = arith.constant 0 : i32
    %c0_i32_0 = arith.constant 0 : i32
    return %arg0, %c0_i32 : i32, i32
  }
}

</mosaic_0001>

<llo_original>
// kernel: tpu_custom_call.1
$region0: #{tpu_custom_call.1}
  #allocation0 [shape = 'u32[]', space=smem, size = 0x4, offset = 0x4, fixed_abs, tag = 'smem constant byte address 0x4 - core index']
  #allocation1 [shape = 'u32[72,128]{1,0:T(1,128)}', space=vmem, size = 0x9000, scoped, tag = 'internal scratch']
  #allocation2 [shape = 'f32[1,1]{1,0:T(1,128)S(1)}', space=vmem, size = 0x200, scoped, tag = 'scoped memory for tpu_custom_call.1']
  %s0 = inlined_call_operand.hbm [shape: f32[16,32], index: 0, kind: input, shape index: {}]
  %s1 = inlined_call_operand.hbm [shape: bf16[32,512], index: 1, kind: input, shape index: {}]
  %s2 = inlined_call_operand.hbm [shape: f32[1,512], index: 2, kind: input, shape index: {}]
  %s3 = inlined_call_operand.hbm [shape: bf16[512,256], index: 3, kind: input, shape index: {}]
  %s4 = inlined_call_operand.vmem [shape: f32[1,256], index: 4, kind: input, shape index: {}]
  %s5 = inlined_call_operand.hbm [shape: bf16[256,128], index: 5, kind: input, shape index: {}]
  %s6 = inlined_call_operand.vmem [shape: f32[1,128], index: 6, kind: input, shape index: {}]
  %s7 = inlined_call_operand.vmem [shape: f32[1,128], index: 7, kind: input, shape index: {}]
  %s8 = inlined_call_operand.<no memory space> [shape: f32[1,1], index: 8, kind: input, shape index: {}]
  %s9 = inlined_call_operand.vmem [shape: f32[16,1], index: 9, kind: output, shape index: {}]
  %s10 = sld [smem:[#allocation0]]
  $region66: #{tpu_custom_call.1} parent=0
    _
  %s12 = ssub.s32 1, %s10
  %s13 = scalar_select 0, %s12, %s10
  %v14 = vstv %s8
  %15 = vst [vmem:[#allocation2] sm:$0x1] %v14
  $region1: #{tpu_custom_call.1} parent=0
    #allocation3 [shape = 'u8[8192]{0}', space=vmem, size = 0x2000, scoped, tag = 'input window, operand 0, single buffered']
    #allocation4 [shape = 's32[1]{0}', space=sflag, size = 0x4, scoped, tag = 'scoped memory for tpu_custom_call.1']
    #allocation5 [shape = 'u8[32768]{0}', space=vmem, size = 0x8000, scoped, tag = 'input window, operand 1, single buffered']
    #allocation6 [shape = 's32[1]{0}', space=sflag, size = 0x4, scoped, tag = 'scoped memory for tpu_custom_call.1']
    #allocation7 [shape = 'u8[2048]{0}', space=vmem, size = 0x800, scoped, tag = 'input window, operand 2, single buffered']
    #allocation8 [shape = 'u8[262144]{0}', space=vmem, size = 0x40000, scoped, tag = 'input window, operand 3, single buffered']
    #allocation9 [shape = 's32[1]{0}', space=sflag, size = 0x4, scoped, tag = 'scoped memory for tpu_custom_call.1']
    #allocation10 [shape = 'u8[65536]{0}', space=vmem, size = 0x10000, scoped, tag = 'input window, operand 5, single buffered']
    %16 = vsyncpa [#allocation4], 0
    %17 = vsyncpa [#allocation6], 0
    %18 = vsyncpa [#allocation9], 0
    // Predicated region
    $region2: #{tpu_custom_call.1} parent=1 // pred_check
      _
    $region3: #{tpu_custom_call.1} parent=1 // pred_check_branch
      %20 = sbr.rel (0) target = $region5
    $region4: #{tpu_custom_call.1} parent=1 // pred_region
      %22 = vsyncadd [#allocation4], 0
      %s23 = sshll.u32 %s0, 4
      %s24 = int_to_ptr.hbm [resolvable:$true] %s23
      %s25 = sshll.u32 [#allocation3], 4
      %s26 = int_to_ptr.vmem [resolvable:$true] %s25
      %31 = dma.hbm_to_vmem [thread:$0]  %s24, 256, %s26, [#allocation4], 128, 128, 8
    $region5: #{tpu_custom_call.1} parent=1 // pred_fallthru
      _
    // Predicated region
    $region6: #{tpu_custom_call.1} parent=1 // pred_check
      _
    $region7: #{tpu_custom_call.1} parent=1 // pred_check_branch
      %33 = sbr.rel (0) target = $region9
    $region8: #{tpu_custom_call.1} parent=1 // pred_region
      %35 = vsyncadd [#allocation6], 0
      %s36 = sshll.u32 %s1, 4
      %s37 = int_to_ptr.hbm [resolvable:$true] %s36
      %s38 = sshll.u32 [#allocation5], 4
      %s39 = int_to_ptr.vmem [resolvable:$true] %s38
      %44 = dma.hbm_to_vmem [thread:$0]  %s37, 1024, %s39, [#allocation6], 256, 256, 16
    $region9: #{tpu_custom_call.1} parent=1 // pred_fallthru
      _
    // Predicated region
    $region10: #{tpu_custom_call.1} parent=1 // pred_check
      _
    $region11: #{tpu_custom_call.1} parent=1 // pred_check_branch
      %46 = sbr.rel (0) target = $region13
    $region12: #{tpu_custom_call.1} parent=1 // pred_region
      %48 = vsyncadd [#allocation6], 0
      %s50 = sshll.u32 %s2, 4
      %s51 = int_to_ptr.hbm [resolvable:$true] %s50
      %s52 = sshll.u32 [#allocation7], 4
      %s53 = int_to_ptr.vmem [resolvable:$true] %s52
      %55 = dma.hbm_to_vmem [thread:$0]  %s51, 64, %s53, [#allocation6]
    $region13: #{tpu_custom_call.1} parent=1 // pred_fallthru
      _
    // Predicated region
    $region14: #{tpu_custom_call.1} parent=1 // pred_check
      _
    $region15: #{tpu_custom_call.1} parent=1 // pred_check_branch
      %57 = sbr.rel (0) target = $region17
    $region16: #{tpu_custom_call.1} parent=1 // pred_region
      %59 = vsyncadd [#allocation9], 0
      %s60 = sshll.u32 %s3, 4
      %s61 = int_to_ptr.hbm [resolvable:$true] %s60
      %s62 = sshll.u32 [#allocation8], 4
      %s63 = int_to_ptr.vmem [resolvable:$true] %s62
      %68 = dma.hbm_to_vmem [thread:$0]  %s61, 8192, %s63, [#allocation9], 128, 128, 8
    $region17: #{tpu_custom_call.1} parent=1 // pred_fallthru
      _
    // Predicated region
    $region18: #{tpu_custom_call.1} parent=1 // pred_check
      _
    $region19: #{tpu_custom_call.1} parent=1 // pred_check_branch
      %70 = sbr.rel (0) target = $region21
    $region20: #{tpu_custom_call.1} parent=1 // pred_region
      _
    $region21: #{tpu_custom_call.1} parent=1 // pred_fallthru
      _
    // Predicated region
    $region22: #{tpu_custom_call.1} parent=1 // pred_check
      _
    $region23: #{tpu_custom_call.1} parent=1 // pred_check_branch
      %72 = sbr.rel (0) target = $region25
    $region24: #{tpu_custom_call.1} parent=1 // pred_region
      %74 = vsyncadd [#allocation9], 0
      %s75 = sshll.u32 %s5, 4
      %s76 = int_to_ptr.hbm [resolvable:$true] %s75
      %s77 = sshll.u32 [#allocation10], 4
      %s78 = int_to_ptr.vmem [resolvable:$true] %s77
      %83 = dma.hbm_to_vmem [thread:$0]  %s76, 2048, %s78, [#allocation9], 64, 64, 4
    $region25: #{tpu_custom_call.1} parent=1 // pred_fallthru
      _
    // Predicated region
    $region26: #{tpu_custom_call.1} parent=1 // pred_check
      _
    $region27: #{tpu_custom_call.1} parent=1 // pred_check_branch
      %85 = sbr.rel (0) target = $region29
    $region28: #{tpu_custom_call.1} parent=1 // pred_region
      _
    $region29: #{tpu_custom_call.1} parent=1 // pred_fallthru
      _
    // Predicated region
    $region30: #{tpu_custom_call.1} parent=1 // pred_check
      _
    $region31: #{tpu_custom_call.1} parent=1 // pred_check_branch
      %87 = sbr.rel (0) target = $region33
    $region32: #{tpu_custom_call.1} parent=1 // pred_region
      _
    $region33: #{tpu_custom_call.1} parent=1 // pred_fallthru
      _
    // Predicated region
    $region34: #{tpu_custom_call.1} parent=1 // pred_check
      _
    $region35: #{tpu_custom_call.1} parent=1 // pred_check_branch
      %89 = sbr.rel (0) target = $region37
    $region36: #{tpu_custom_call.1} parent=1 // pred_region
      _
    $region37: #{tpu_custom_call.1} parent=1 // pred_fallthru
      _
    // Predicated region
    $region38: #{tpu_custom_call.1} parent=1 // pred_check
      _
    $region39: #{tpu_custom_call.1} parent=1 // pred_check_branch
      %91 = sbr.rel (0) target = $region41
    $region40: #{tpu_custom_call.1} parent=1 // pred_region
      %93 = dma.done [#allocation4], 256
    $region41: #{tpu_custom_call.1} parent=1 // pred_fallthru
      _
    // Predicated region
    $region42: #{tpu_custom_call.1} parent=1 // pred_check
      _
    $region43: #{tpu_custom_call.1} parent=1 // pred_check_branch
      %95 = sbr.rel (0) target = $region45
    $region44: #{tpu_custom_call.1} parent=1 // pred_region
      %97 = dma.done [#allocation6], 1024
    $region45: #{tpu_custom_call.1} parent=1 // pred_fallthru
      _
    // Predicated region
    $region46: #{tpu_custom_call.1} parent=1 // pred_check
      _
    $region47: #{tpu_custom_call.1} parent=1 // pred_check_branch
      %99 = sbr.rel (0) target = $region49
    $region48: #{tpu_custom_call.1} parent=1 // pred_region
      %101 = dma.done [#allocation6], 64
    $region49: #{tpu_custom_call.1} parent=1 // pred_fallthru
      _
    // Predicated region
    $region50: #{tpu_custom_call.1} parent=1 // pred_check
      _
    $region51: #{tpu_custom_call.1} parent=1 // pred_check_branch
      %103 = sbr.rel (0) target = $region53
    $region52: #{tpu_custom_call.1} parent=1 // pred_region
      %105 = dma.done [#allocation9], 8192
    $region53: #{tpu_custom_call.1} parent=1 // pred_fallthru
      _
    // Predicated region
    $region54: #{tpu_custom_call.1} parent=1 // pred_check
      _
    $region55: #{tpu_custom_call.1} parent=1 // pred_check_branch
      %107 = sbr.rel (0) target = $region57
    $region56: #{tpu_custom_call.1} parent=1 // pred_region
      %109 = dma.done [#allocation9], 2048
    $region57: #{tpu_custom_call.1} parent=1 // pred_fallthru
      _
    %v111 = vld [vmem:[#allocation3] sm:$0xff]
    %v112 = vld [vmem:[#allocation3 + $0x8] sm:$0xff]
    %v113 = vpack.c.bf16 %v112, %v111
    %v114 = vld [vmem:[#allocation5] sm:$0xff]
    %v115 = vld [vmem:[#allocation5 + $0x8] sm:$0xff]
    %v116 = vld [vmem:[#allocation5 + $0x10] sm:$0xff]
    %v117 = vld [vmem:[#allocation5 + $0x18] sm:$0xff]
    %v118 = vld [vmem:[#allocation5 + $0x20] sm:$0xff]
    %v119 = vld [vmem:[#allocation5 + $0x28] sm:$0xff]
    %v120 = vld [vmem:[#allocation5 + $0x30] sm:$0xff]
    %v121 = vld [vmem:[#allocation5 + $0x38] sm:$0xff]
    %v122 = vld [vmem:[#allocation7] sm:$0xf]
    %v124 = vperm.slane %v122, 0
    %v125 = vperm.slane %v122, 1
    %v126 = vperm.slane %v122, 2
    %v127 = vperm.slane %v122, 3
    %v140 = vunpack.c.l.b16 %v114
    %v141 = vunpack.c.h.b16 %v114
    %v142 = vunpack.c.l.b16 %v115
    %v143 = vunpack.c.h.b16 %v115
    %v144 = vunpack.c.l.b16 %v116
    %v145 = vunpack.c.h.b16 %v116
    %v146 = vunpack.c.l.b16 %v117
    %v147 = vunpack.c.h.b16 %v117
    %v148 = vunpack.c.l.b16 %v118
    %v149 = vunpack.c.h.b16 %v118
    %v150 = vunpack.c.l.b16 %v119
    %v151 = vunpack.c.h.b16 %v119
    %v152 = vunpack.c.l.b16 %v120
    %v153 = vunpack.c.h.b16 %v120
    %v154 = vunpack.c.l.b16 %v121
    %v155 = vunpack.c.h.b16 %v121
    %v156 = vpack.c.b16 %v144, %v140
    %v157 = vpack.c.b16 %v145, %v141
    %v158 = vpack.c.b16 %v146, %v142
    %v159 = vpack.c.b16 %v147, %v143
    %v160 = vpack.c.b16 %v152, %v148
    %v161 = vpack.c.b16 %v153, %v149
    %v162 = vpack.c.b16 %v154, %v150
    %v163 = vpack.c.b16 %v155, %v151
    %vm172 = vcmask 261120
    %v174 = vsel %vm172, %v113, 0
    %176 = vmatpush.bf16.msra.mxu0 0
    %177 = vmatpush.bf16.msra.mxu0 0
    %178 = vmatpush.bf16.msra.mxu0 0
    %179 = vmatpush.bf16.msra.mxu0 0
    %180 = vmatpush.bf16.msra.mxu0 0
    %181 = vmatpush.bf16.msra.mxu0 0
    %182 = vmatpush.bf16.msra.mxu0 %v160
    %183 = vmatpush.bf16.msra.mxu0 %v156
    %184 = vmatmul.bf16.gmra.mxu0 %v174
    %v185 = vpop.f32.mrf.mxu0
    %v186 = vadd.f32 %v124, %v185
    %v187 = vpop.f32.mrf.mxu0
    %v188 = vadd.f32 %v124, %v187
    %189 = vdwg.mxu0
    %190 = vmatpush.bf16.msra.mxu0 0
    %191 = vmatpush.bf16.msra.mxu0 0
    %192 = vmatpush.bf16.msra.mxu0 0
    %193 = vmatpush.bf16.msra.mxu0 0
    %194 = vmatpush.bf16.msra.mxu0 0
    %195 = vmatpush.bf16.msra.mxu0 0
    %196 = vmatpush.bf16.msra.mxu0 %v161
    %197 = vmatpush.bf16.msra.mxu0 %v157
    %198 = vmatmul.bf16.gmra.mxu0 %v174
    %v199 = vpop.f32.mrf.mxu0
    %v200 = vadd.f32 %v125, %v199
    %v201 = vpop.f32.mrf.mxu0
    %v202 = vadd.f32 %v125, %v201
    %203 = vdwg.mxu0
    %204 = vmatpush.bf16.msra.mxu0 0
    %205 = vmatpush.bf16.msra.mxu0 0
    %206 = vmatpush.bf16.msra.mxu0 0
    %207 = vmatpush.bf16.msra.mxu0 0
    %208 = vmatpush.bf16.msra.mxu0 0
    %209 = vmatpush.bf16.msra.mxu0 0
    %210 = vmatpush.bf16.msra.mxu0 %v162
    %211 = vmatpush.bf16.msra.mxu0 %v158
    %212 = vmatmul.bf16.gmra.mxu0 %v174
    %v213 = vpop.f32.mrf.mxu0
    %v214 = vadd.f32 %v126, %v213
    %v215 = vpop.f32.mrf.mxu0
    %v216 = vadd.f32 %v126, %v215
    %217 = vdwg.mxu0
    %218 = vmatpush.bf16.msra.mxu0 0
    %219 = vmatpush.bf16.msra.mxu0 0
    %220 = vmatpush.bf16.msra.mxu0 0
    %221 = vmatpush.bf16.msra.mxu0 0
    %222 = vmatpush.bf16.msra.mxu0 0
    %223 = vmatpush.bf16.msra.mxu0 0
    %224 = vmatpush.bf16.msra.mxu0 %v163
    %225 = vmatpush.bf16.msra.mxu0 %v159
    %226 = vmatmul.bf16.gmra.mxu0 %v174
    %v227 = vpop.f32.mrf.mxu0
    %v228 = vadd.f32 %v127, %v227
    %v229 = vpop.f32.mrf.mxu0
    %v230 = vadd.f32 %v127, %v229
    %231 = vdwg.mxu0
    %vm232 = vcmp.gt.f32.partialorder %v186, 0.0
    %vm233 = vcmp.gt.f32.partialorder %v200, 0.0
    %vm234 = vcmp.gt.f32.partialorder %v214, 0.0
    %vm235 = vcmp.gt.f32.partialorder %v228, 0.0
    %vm236 = vcmp.gt.f32.partialorder %v188, 0.0
    %vm237 = vcmp.gt.f32.partialorder %v202, 0.0
    %vm238 = vcmp.gt.f32.partialorder %v216, 0.0
    %vm239 = vcmp.gt.f32.partialorder %v230, 0.0
    %v240 = vmul.f32 %v186, 0.2
    %v241 = vmul.f32 %v200, 0.2
    %v242 = vmul.f32 %v214, 0.2
    %v243 = vmul.f32 %v228, 0.2
    %v244 = vmul.f32 %v188, 0.2
    %v245 = vmul.f32 %v202, 0.2
    %v246 = vmul.f32 %v216, 0.2
    %v247 = vmul.f32 %v230, 0.2
    %v248 = vsel %vm232, %v186, %v240
    %v249 = vsel %vm233, %v200, %v241
    %v250 = vsel %vm234, %v214, %v242
    %v251 = vsel %vm235, %v228, %v243
    %v252 = vsel %vm236, %v188, %v244
    %v253 = vsel %vm237, %v202, %v245
    %v254 = vsel %vm238, %v216, %v246
    %v255 = vsel %vm239, %v230, %v247
    %v256 = vpack.c.bf16 %v252, %v248
    %v257 = vpack.c.bf16 %v253, %v249
    %v258 = vpack.c.bf16 %v254, %v250
    %v259 = vpack.c.bf16 %v255, %v251
    %v260 = vld [vmem:[#allocation8] sm:$0xff]
    %v261 = vld [vmem:[#allocation8 + $0x8] sm:$0xff]
    %v262 = vld [vmem:[#allocation8 + $0x10] sm:$0xff]
    %v263 = vld [vmem:[#allocation8 + $0x18] sm:$0xff]
    %v264 = vld [vmem:[#allocation8 + $0x20] sm:$0xff]
    %v265 = vld [vmem:[#allocation8 + $0x28] sm:$0xff]
    %v266 = vld [vmem:[#allocation8 + $0x30] sm:$0xff]
    %v267 = vld [vmem:[#allocation8 + $0x38] sm:$0xff]
    %v268 = vld [vmem:[#allocation8 + $0x40] sm:$0xff]
    %v269 = vld [vmem:[#allocation8 + $0x48] sm:$0xff]
    %v270 = vld [vmem:[#allocation8 + $0x50] sm:$0xff]
    %v271 = vld [vmem:[#allocation8 + $0x58] sm:$0xff]
    %v272 = vld [vmem:[#allocation8 + $0x60] sm:$0xff]
    %v273 = vld [vmem:[#allocation8 + $0x68] sm:$0xff]
    %v274 = vld [vmem:[#allocation8 + $0x70] sm:$0xff]
    %v275 = vld [vmem:[#allocation8 + $0x78] sm:$0xff]
    %v276 = vld [vmem:[#allocation8 + $0x80] sm:$0xff]
    %v277 = vld [vmem:[#allocation8 + $0x88] sm:$0xff]
    %v278 = vld [vmem:[#allocation8 + $0x90] sm:$0xff]
    %v279 = vld [vmem:[#allocation8 + $0x98] sm:$0xff]
    %v280 = vld [vmem:[#allocation8 + $0xa0] sm:$0xff]
    %v281 = vld [vmem:[#allocation8 + $0xa8] sm:$0xff]
    %v282 = vld [vmem:[#allocation8 + $0xb0] sm:$0xff]
    %v283 = vld [vmem:[#allocation8 + $0xb8] sm:$0xff]
    %v284 = vld [vmem:[#allocation8 + $0xc0] sm:$0xff]
    %v285 = vld [vmem:[#allocation8 + $0xc8] sm:$0xff]
    %v286 = vld [vmem:[#allocation8 + $0xd0] sm:$0xff]
    %v287 = vld [vmem:[#allocation8 + $0xd8] sm:$0xff]
    %v288 = vld [vmem:[#allocation8 + $0xe0] sm:$0xff]
    %v289 = vld [vmem:[#allocation8 + $0xe8] sm:$0xff]
    %v290 = vld [vmem:[#allocation8 + $0xf0] sm:$0xff]
    %v291 = vld [vmem:[#allocation8 + $0xf8] sm:$0xff]
    %v292 = vld [vmem:[#allocation8 + $0x100] sm:$0xff]
    %v293 = vld [vmem:[#allocation8 + $0x108] sm:$0xff]
    %v294 = vld [vmem:[#allocation8 + $0x110] sm:$0xff]
    %v295 = vld [vmem:[#allocation8 + $0x118] sm:$0xff]
    %v296 = vld [vmem:[#allocation8 + $0x120] sm:$0xff]
    %v297 = vld [vmem:[#allocation8 + $0x128] sm:$0xff]
    %v298 = vld [vmem:[#allocation8 + $0x130] sm:$0xff]
    %v299 = vld [vmem:[#allocation8 + $0x138] sm:$0xff]
    %v300 = vld [vmem:[#allocation8 + $0x140] sm:$0xff]
    %v301 = vld [vmem:[#allocation8 + $0x148] sm:$0xff]
    %v302 = vld [vmem:[#allocation8 + $0x150] sm:$0xff]
    %v303 = vld [vmem:[#allocation8 + $0x158] sm:$0xff]
    %v304 = vld [vmem:[#allocation8 + $0x160] sm:$0xff]
    %v305 = vld [vmem:[#allocation8 + $0x168] sm:$0xff]
    %v306 = vld [vmem:[#allocation8 + $0x170] sm:$0xff]
    %v307 = vld [vmem:[#allocation8 + $0x178] sm:$0xff]
    %v308 = vld [vmem:[#allocation8 + $0x180] sm:$0xff]
    %v309 = vld [vmem:[#allocation8 + $0x188] sm:$0xff]
    %v310 = vld [vmem:[#allocation8 + $0x190] sm:$0xff]
    %v311 = vld [vmem:[#allocation8 + $0x198] sm:$0xff]
    %v312 = vld [vmem:[#allocation8 + $0x1a0] sm:$0xff]
    %v313 = vld [vmem:[#allocation8 + $0x1a8] sm:$0xff]
    %v314 = vld [vmem:[#allocation8 + $0x1b0] sm:$0xff]
    %v315 = vld [vmem:[#allocation8 + $0x1b8] sm:$0xff]
    %v316 = vld [vmem:[#allocation8 + $0x1c0] sm:$0xff]
    %v317 = vld [vmem:[#allocation8 + $0x1c8] sm:$0xff]
    %v318 = vld [vmem:[#allocation8 + $0x1d0] sm:$0xff]
    %v319 = vld [vmem:[#allocation8 + $0x1d8] sm:$0xff]
    %v320 = vld [vmem:[#allocation8 + $0x1e0] sm:$0xff]
    %v321 = vld [vmem:[#allocation8 + $0x1e8] sm:$0xff]
    %v322 = vld [vmem:[#allocation8 + $0x1f0] sm:$0xff]
    %v323 = vld [vmem:[#allocation8 + $0x1f8] sm:$0xff]
    %v324 = vld [vmem:[%s4] sm:$0x3]
    %v326 = vperm.slane %v324, 0
    %v327 = vperm.slane %v324, 1
    %v394 = vunpack.c.l.b16 %v260
    %v395 = vunpack.c.h.b16 %v260
    %v396 = vunpack.c.l.b16 %v261
    %v397 = vunpack.c.h.b16 %v261
    %v398 = vunpack.c.l.b16 %v262
    %v399 = vunpack.c.h.b16 %v262
    %v400 = vunpack.c.l.b16 %v263
    %v401 = vunpack.c.h.b16 %v263
    %v402 = vunpack.c.l.b16 %v264
    %v403 = vunpack.c.h.b16 %v264
    %v404 = vunpack.c.l.b16 %v265
    %v405 = vunpack.c.h.b16 %v265
    %v406 = vunpack.c.l.b16 %v266
    %v407 = vunpack.c.h.b16 %v266
    %v408 = vunpack.c.l.b16 %v267
    %v409 = vunpack.c.h.b16 %v267
    %v410 = vunpack.c.l.b16 %v268
    %v411 = vunpack.c.h.b16 %v268
    %v412 = vunpack.c.l.b16 %v269
    %v413 = vunpack.c.h.b16 %v269
    %v414 = vunpack.c.l.b16 %v270
    %v415 = vunpack.c.h.b16 %v270
    %v416 = vunpack.c.l.b16 %v271
    %v417 = vunpack.c.h.b16 %v271
    %v418 = vunpack.c.l.b16 %v272
    %v419 = vunpack.c.h.b16 %v272
    %v420 = vunpack.c.l.b16 %v273
    %v421 = vunpack.c.h.b16 %v273
    %v422 = vunpack.c.l.b16 %v274
    %v423 = vunpack.c.h.b16 %v274
    %v424 = vunpack.c.l.b16 %v275
    %v425 = vunpack.c.h.b16 %v275
    %v426 = vunpack.c.l.b16 %v276
    %v427 = vunpack.c.h.b16 %v276
    %v428 = vunpack.c.l.b16 %v277
    %v429 = vunpack.c.h.b16 %v277
    %v430 = vunpack.c.l.b16 %v278
    %v431 = vunpack.c.h.b16 %v278
    %v432 = vunpack.c.l.b16 %v279
    %v433 = vunpack.c.h.b16 %v279
    %v434 = vunpack.c.l.b16 %v280
    %v435 = vunpack.c.h.b16 %v280
    %v436 = vunpack.c.l.b16 %v281
    %v437 = vunpack.c.h.b16 %v281
    %v438 = vunpack.c.l.b16 %v282
    %v439 = vunpack.c.h.b16 %v282
    %v440 = vunpack.c.l.b16 %v283
    %v441 = vunpack.c.h.b16 %v283
    %v442 = vunpack.c.l.b16 %v284
    %v443 = vunpack.c.h.b16 %v284
    %v444 = vunpack.c.l.b16 %v285
    %v445 = vunpack.c.h.b16 %v285
    %v446 = vunpack.c.l.b16 %v286
    %v447 = vunpack.c.h.b16 %v286
    %v448 = vunpack.c.l.b16 %v287
    %v449 = vunpack.c.h.b16 %v287
    %v450 = vunpack.c.l.b16 %v288
    %v451 = vunpack.c.h.b16 %v288
    %v452 = vunpack.c.l.b16 %v289
    %v453 = vunpack.c.h.b16 %v289
    %v454 = vunpack.c.l.b16 %v290
    %v455 = vunpack.c.h.b16 %v290
    %v456 = vunpack.c.l.b16 %v291
    %v457 = vunpack.c.h.b16 %v291
    %v458 = vunpack.c.l.b16 %v292
    %v459 = vunpack.c.h.b16 %v292
    %v460 = vunpack.c.l.b16 %v293
    %v461 = vunpack.c.h.b16 %v293
    %v462 = vunpack.c.l.b16 %v294
    %v463 = vunpack.c.h.b16 %v294
    %v464 = vunpack.c.l.b16 %v295
    %v465 = vunpack.c.h.b16 %v295
    %v466 = vunpack.c.l.b16 %v296
    %v467 = vunpack.c.h.b16 %v296
    %v468 = vunpack.c.l.b16 %v297
    %v469 = vunpack.c.h.b16 %v297
    %v470 = vunpack.c.l.b16 %v298
    %v471 = vunpack.c.h.b16 %v298
    %v472 = vunpack.c.l.b16 %v299
    %v473 = vunpack.c.h.b16 %v299
    %v474 = vunpack.c.l.b16 %v300
    %v475 = vunpack.c.h.b16 %v300
    %v476 = vunpack.c.l.b16 %v301
    %v477 = vunpack.c.h.b16 %v301
    %v478 = vunpack.c.l.b16 %v302
    %v479 = vunpack.c.h.b16 %v302
    %v480 = vunpack.c.l.b16 %v303
    %v481 = vunpack.c.h.b16 %v303
    %v482 = vunpack.c.l.b16 %v304
    %v483 = vunpack.c.h.b16 %v304
    %v484 = vunpack.c.l.b16 %v305
    %v485 = vunpack.c.h.b16 %v305
    %v486 = vunpack.c.l.b16 %v306
    %v487 = vunpack.c.h.b16 %v306
    %v488 = vunpack.c.l.b16 %v307
    %v489 = vunpack.c.h.b16 %v307
    %v490 = vunpack.c.l.b16 %v308
    %v491 = vunpack.c.h.b16 %v308
    %v492 = vunpack.c.l.b16 %v309
    %v493 = vunpack.c.h.b16 %v309
    %v494 = vunpack.c.l.b16 %v310
    %v495 = vunpack.c.h.b16 %v310
    %v496 = vunpack.c.l.b16 %v311
    %v497 = vunpack.c.h.b16 %v311
    %v498 = vunpack.c.l.b16 %v312
    %v499 = vunpack.c.h.b16 %v312
    %v500 = vunpack.c.l.b16 %v313
    %v501 = vunpack.c.h.b16 %v313
    %v502 = vunpack.c.l.b16 %v314
    %v503 = vunpack.c.h.b16 %v314
    %v504 = vunpack.c.l.b16 %v315
    %v505 = vunpack.c.h.b16 %v315
    %v506 = vunpack.c.l.b16 %v316
    %v507 = vunpack.c.h.b16 %v316
    %v508 = vunpack.c.l.b16 %v317
    %v509 = vunpack.c.h.b16 %v317
    %v510 = vunpack.c.l.b16 %v318
    %v511 = vunpack.c.h.b16 %v318
    %v512 = vunpack.c.l.b16 %v319
    %v513 = vunpack.c.h.b16 %v319
    %v514 = vunpack.c.l.b16 %v320
    %v515 = vunpack.c.h.b16 %v320
    %v516 = vunpack.c.l.b16 %v321
    %v517 = vunpack.c.h.b16 %v321
    %v518 = vunpack.c.l.b16 %v322
    %v519 = vunpack.c.h.b16 %v322
    %v520 = vunpack.c.l.b16 %v323
    %v521 = vunpack.c.h.b16 %v323
    %v522 = vpack.c.b16 %v396, %v394
    %v523 = vpack.c.b16 %v397, %v395
    %v524 = vpack.c.b16 %v400, %v398
    %v525 = vpack.c.b16 %v401, %v399
    %v526 = vpack.c.b16 %v404, %v402
    %v527 = vpack.c.b16 %v405, %v403
    %v528 = vpack.c.b16 %v408, %v406
    %v529 = vpack.c.b16 %v409, %v407
    %v530 = vpack.c.b16 %v412, %v410
    %v531 = vpack.c.b16 %v413, %v411
    %v532 = vpack.c.b16 %v416, %v414
    %v533 = vpack.c.b16 %v417, %v415
    %v534 = vpack.c.b16 %v420, %v418
    %v535 = vpack.c.b16 %v421, %v419
    %v536 = vpack.c.b16 %v424, %v422
    %v537 = vpack.c.b16 %v425, %v423
    %v538 = vpack.c.b16 %v428, %v426
    %v539 = vpack.c.b16 %v429, %v427
    %v540 = vpack.c.b16 %v432, %v430
    %v541 = vpack.c.b16 %v433, %v431
    %v542 = vpack.c.b16 %v436, %v434
    %v543 = vpack.c.b16 %v437, %v435
    %v544 = vpack.c.b16 %v440, %v438
    %v545 = vpack.c.b16 %v441, %v439
    %v546 = vpack.c.b16 %v444, %v442
    %v547 = vpack.c.b16 %v445, %v443
    %v548 = vpack.c.b16 %v448, %v446
    %v549 = vpack.c.b16 %v449, %v447
    %v550 = vpack.c.b16 %v452, %v450
    %v551 = vpack.c.b16 %v453, %v451
    %v552 = vpack.c.b16 %v456, %v454
    %v553 = vpack.c.b16 %v457, %v455
    %v554 = vpack.c.b16 %v460, %v458
    %v555 = vpack.c.b16 %v461, %v459
    %v556 = vpack.c.b16 %v464, %v462
    %v557 = vpack.c.b16 %v465, %v463
    %v558 = vpack.c.b16 %v468, %v466
    %v559 = vpack.c.b16 %v469, %v467
    %v560 = vpack.c.b16 %v472, %v470
    %v561 = vpack.c.b16 %v473, %v471
    %v562 = vpack.c.b16 %v476, %v474
    %v563 = vpack.c.b16 %v477, %v475
    %v564 = vpack.c.b16 %v480, %v478
    %v565 = vpack.c.b16 %v481, %v479
    %v566 = vpack.c.b16 %v484, %v482
    %v567 = vpack.c.b16 %v485, %v483
    %v568 = vpack.c.b16 %v488, %v486
    %v569 = vpack.c.b16 %v489, %v487
    %v570 = vpack.c.b16 %v492, %v490
    %v571 = vpack.c.b16 %v493, %v491
    %v572 = vpack.c.b16 %v496, %v494
    %v573 = vpack.c.b16 %v497, %v495
    %v574 = vpack.c.b16 %v500, %v498
    %v575 = vpack.c.b16 %v501, %v499
    %v576 = vpack.c.b16 %v504, %v502
    %v577 = vpack.c.b16 %v505, %v503
    %v578 = vpack.c.b16 %v508, %v506
    %v579 = vpack.c.b16 %v509, %v507
    %v580 = vpack.c.b16 %v512, %v510
    %v581 = vpack.c.b16 %v513, %v511
    %v582 = vpack.c.b16 %v516, %v514
    %v583 = vpack.c.b16 %v517, %v515
    %v584 = vpack.c.b16 %v520, %v518
    %v585 = vpack.c.b16 %v521, %v519
    %650 = vmatpush.bf16.msra.mxu0 %v536
    %651 = vmatpush.bf16.msra.mxu0 %v534
    %652 = vmatpush.bf16.msra.mxu0 %v532
    %653 = vmatpush.bf16.msra.mxu0 %v530
    %654 = vmatpush.bf16.msra.mxu0 %v528
    %655 = vmatpush.bf16.msra.mxu0 %v526
    %656 = vmatpush.bf16.msra.mxu0 %v524
    %657 = vmatpush.bf16.msra.mxu0 %v522
    %658 = vmatmul.bf16.gmra.mxu0 %v256
    %v659 = vpop.f32.mrf.mxu0
    %v660 = vadd.f32 %v326, %v659
    %v661 = vpop.f32.mrf.mxu0
    %v662 = vadd.f32 %v326, %v661
    %663 = vdwg.mxu0
    %664 = vmatpush.bf16.msra.mxu0 %v552
    %665 = vmatpush.bf16.msra.mxu0 %v550
    %666 = vmatpush.bf16.msra.mxu0 %v548
    %667 = vmatpush.bf16.msra.mxu0 %v546
    %668 = vmatpush.bf16.msra.mxu0 %v544
    %669 = vmatpush.bf16.msra.mxu0 %v542
    %670 = vmatpush.bf16.msra.mxu0 %v540
    %671 = vmatpush.bf16.msra.mxu0 %v538
    %672 = vmatmul.bf16.gmra.mxu0 %v257
    %v673 = vpop.f32.mrf.mxu0
    %v674 = vadd.f32 %v660, %v673
    %v675 = vpop.f32.mrf.mxu0
    %v676 = vadd.f32 %v662, %v675
    %677 = vdwg.mxu0
    %678 = vmatpush.bf16.msra.mxu0 %v568
    %679 = vmatpush.bf16.msra.mxu0 %v566
    %680 = vmatpush.bf16.msra.mxu0 %v564
    %681 = vmatpush.bf16.msra.mxu0 %v562
    %682 = vmatpush.bf16.msra.mxu0 %v560
    %683 = vmatpush.bf16.msra.mxu0 %v558
    %684 = vmatpush.bf16.msra.mxu0 %v556
    %685 = vmatpush.bf16.msra.mxu0 %v554
    %686 = vmatmul.bf16.gmra.mxu0 %v258
    %v687 = vpop.f32.mrf.mxu0
    %v688 = vadd.f32 %v674, %v687
    %v689 = vpop.f32.mrf.mxu0
    %v690 = vadd.f32 %v676, %v689
    %691 = vdwg.mxu0
    %692 = vmatpush.bf16.msra.mxu0 %v584
    %693 = vmatpush.bf16.msra.mxu0 %v582
    %694 = vmatpush.bf16.msra.mxu0 %v580
    %695 = vmatpush.bf16.msra.mxu0 %v578
    %696 = vmatpush.bf16.msra.mxu0 %v576
    %697 = vmatpush.bf16.msra.mxu0 %v574
    %698 = vmatpush.bf16.msra.mxu0 %v572
    %699 = vmatpush.bf16.msra.mxu0 %v570
    %700 = vmatmul.bf16.gmra.mxu0 %v259
    %v701 = vpop.f32.mrf.mxu0
    %v702 = vadd.f32 %v688, %v701
    %v703 = vpop.f32.mrf.mxu0
    %v704 = vadd.f32 %v690, %v703
    %705 = vdwg.mxu0
    %706 = vmatpush.bf16.msra.mxu0 %v537
    %707 = vmatpush.bf16.msra.mxu0 %v535
    %708 = vmatpush.bf16.msra.mxu0 %v533
    %709 = vmatpush.bf16.msra.mxu0 %v531
    %710 = vmatpush.bf16.msra.mxu0 %v529
    %711 = vmatpush.bf16.msra.mxu0 %v527
    %712 = vmatpush.bf16.msra.mxu0 %v525
    %713 = vmatpush.bf16.msra.mxu0 %v523
    %714 = vmatmul.bf16.gmra.mxu0 %v256
    %v715 = vpop.f32.mrf.mxu0
    %v716 = vadd.f32 %v327, %v715
    %v717 = vpop.f32.mrf.mxu0
    %v718 = vadd.f32 %v327, %v717
    %719 = vdwg.mxu0
    %720 = vmatpush.bf16.msra.mxu0 %v553
    %721 = vmatpush.bf16.msra.mxu0 %v551
    %722 = vmatpush.bf16.msra.mxu0 %v549
    %723 = vmatpush.bf16.msra.mxu0 %v547
    %724 = vmatpush.bf16.msra.mxu0 %v545
    %725 = vmatpush.bf16.msra.mxu0 %v543
    %726 = vmatpush.bf16.msra.mxu0 %v541
    %727 = vmatpush.bf16.msra.mxu0 %v539
    %728 = vmatmul.bf16.gmra.mxu0 %v257
    %v729 = vpop.f32.mrf.mxu0
    %v730 = vadd.f32 %v716, %v729
    %v731 = vpop.f32.mrf.mxu0
    %v732 = vadd.f32 %v718, %v731
    %733 = vdwg.mxu0
    %734 = vmatpush.bf16.msra.mxu0 %v569
    %735 = vmatpush.bf16.msra.mxu0 %v567
    %736 = vmatpush.bf16.msra.mxu0 %v565
    %737 = vmatpush.bf16.msra.mxu0 %v563
    %738 = vmatpush.bf16.msra.mxu0 %v561
    %739 = vmatpush.bf16.msra.mxu0 %v559
    %740 = vmatpush.bf16.msra.mxu0 %v557
    %741 = vmatpush.bf16.msra.mxu0 %v555
    %742 = vmatmul.bf16.gmra.mxu0 %v258
    %v743 = vpop.f32.mrf.mxu0
    %v744 = vadd.f32 %v730, %v743
    %v745 = vpop.f32.mrf.mxu0
    %v746 = vadd.f32 %v732, %v745
    %747 = vdwg.mxu0
    %748 = vmatpush.bf16.msra.mxu0 %v585
    %749 = vmatpush.bf16.msra.mxu0 %v583
    %750 = vmatpush.bf16.msra.mxu0 %v581
    %751 = vmatpush.bf16.msra.mxu0 %v579
    %752 = vmatpush.bf16.msra.mxu0 %v577
    %753 = vmatpush.bf16.msra.mxu0 %v575
    %754 = vmatpush.bf16.msra.mxu0 %v573
    %755 = vmatpush.bf16.msra.mxu0 %v571
    %756 = vmatmul.bf16.gmra.mxu0 %v259
    %v757 = vpop.f32.mrf.mxu0
    %v758 = vadd.f32 %v744, %v757
    %v759 = vpop.f32.mrf.mxu0
    %v760 = vadd.f32 %v746, %v759
    %761 = vdwg.mxu0
    %vm762 = vcmp.gt.f32.partialorder %v702, 0.0
    %vm763 = vcmp.gt.f32.partialorder %v758, 0.0
    %vm764 = vcmp.gt.f32.partialorder %v704, 0.0
    %vm765 = vcmp.gt.f32.partialorder %v760, 0.0
    %v766 = vmul.f32 %v702, 0.2
    %v767 = vmul.f32 %v758, 0.2
    %v768 = vmul.f32 %v704, 0.2
    %v769 = vmul.f32 %v760, 0.2
    %v770 = vsel %vm762, %v702, %v766
    %v771 = vsel %vm763, %v758, %v767
    %v772 = vsel %vm764, %v704, %v768
    %v773 = vsel %vm765, %v760, %v769
    %v774 = vpack.c.bf16 %v772, %v770
    %v775 = vpack.c.bf16 %v773, %v771
    %v776 = vld [vmem:[#allocation10] sm:$0xf]
    %v777 = vld [vmem:[#allocation10 + $0x4] sm:$0xf]
    %v778 = vld [vmem:[#allocation10 + $0x8] sm:$0xf]
    %v779 = vld [vmem:[#allocation10 + $0xc] sm:$0xf]
    %v780 = vld [vmem:[#allocation10 + $0x10] sm:$0xf]
    %v781 = vld [vmem:[#allocation10 + $0x14] sm:$0xf]
    %v782 = vld [vmem:[#allocation10 + $0x18] sm:$0xf]
    %v783 = vld [vmem:[#allocation10 + $0x1c] sm:$0xf]
    %v784 = vld [vmem:[#allocation10 + $0x20] sm:$0xf]
    %v785 = vld [vmem:[#allocation10 + $0x24] sm:$0xf]
    %v786 = vld [vmem:[#allocation10 + $0x28] sm:$0xf]
    %v787 = vld [vmem:[#allocation10 + $0x2c] sm:$0xf]
    %v788 = vld [vmem:[#allocation10 + $0x30] sm:$0xf]
    %v789 = vld [vmem:[#allocation10 + $0x34] sm:$0xf]
    %v790 = vld [vmem:[#allocation10 + $0x38] sm:$0xf]
    %v791 = vld [vmem:[#allocation10 + $0x3c] sm:$0xf]
    %v792 = vld [vmem:[#allocation10 + $0x40] sm:$0xf]
    %v793 = vld [vmem:[#allocation10 + $0x44] sm:$0xf]
    %v794 = vld [vmem:[#allocation10 + $0x48] sm:$0xf]
    %v795 = vld [vmem:[#allocation10 + $0x4c] sm:$0xf]
    %v796 = vld [vmem:[#allocation10 + $0x50] sm:$0xf]
    %v797 = vld [vmem:[#allocation10 + $0x54] sm:$0xf]
    %v798 = vld [vmem:[#allocation10 + $0x58] sm:$0xf]
    %v799 = vld [vmem:[#allocation10 + $0x5c] sm:$0xf]
    %v800 = vld [vmem:[#allocation10 + $0x60] sm:$0xf]
    %v801 = vld [vmem:[#allocation10 + $0x64] sm:$0xf]
    %v802 = vld [vmem:[#allocation10 + $0x68] sm:$0xf]
    %v803 = vld [vmem:[#allocation10 + $0x6c] sm:$0xf]
    %v804 = vld [vmem:[#allocation10 + $0x70] sm:$0xf]
    %v805 = vld [vmem:[#allocation10 + $0x74] sm:$0xf]
    %v806 = vld [vmem:[#allocation10 + $0x78] sm:$0xf]
    %v807 = vld [vmem:[#allocation10 + $0x7c] sm:$0xf]
    %v808 = vld [vmem:[%s6] sm:$0x1]
    %v810 = vperm.slane %v808, 0
    %v844 = vunpack.c.l.b16 %v776
    %v845 = vunpack.c.l.b16 %v777
    %v846 = vunpack.c.l.b16 %v778
    %v847 = vunpack.c.l.b16 %v779
    %v848 = vunpack.c.l.b16 %v780
    %v849 = vunpack.c.l.b16 %v781
    %v850 = vunpack.c.l.b16 %v782
    %v851 = vunpack.c.l.b16 %v783
    %v852 = vunpack.c.l.b16 %v784
    %v853 = vunpack.c.l.b16 %v785
    %v854 = vunpack.c.l.b16 %v786
    %v855 = vunpack.c.l.b16 %v787
    %v856 = vunpack.c.l.b16 %v788
    %v857 = vunpack.c.l.b16 %v789
    %v858 = vunpack.c.l.b16 %v790
    %v859 = vunpack.c.l.b16 %v791
    %v860 = vunpack.c.l.b16 %v792
    %v861 = vunpack.c.l.b16 %v793
    %v862 = vunpack.c.l.b16 %v794
    %v863 = vunpack.c.l.b16 %v795
    %v864 = vunpack.c.l.b16 %v796
    %v865 = vunpack.c.l.b16 %v797
    %v866 = vunpack.c.l.b16 %v798
    %v867 = vunpack.c.l.b16 %v799
    %v868 = vunpack.c.l.b16 %v800
    %v869 = vunpack.c.l.b16 %v801
    %v870 = vunpack.c.l.b16 %v802
    %v871 = vunpack.c.l.b16 %v803
    %v872 = vunpack.c.l.b16 %v804
    %v873 = vunpack.c.l.b16 %v805
    %v874 = vunpack.c.l.b16 %v806
    %v875 = vunpack.c.l.b16 %v807
    %v876 = vpack.c.b16 %v845, %v844
    %v877 = vpack.c.b16 %v847, %v846
    %v878 = vpack.c.b16 %v849, %v848
    %v879 = vpack.c.b16 %v851, %v850
    %v880 = vpack.c.b16 %v853, %v852
    %v881 = vpack.c.b16 %v855, %v854
    %v882 = vpack.c.b16 %v857, %v856
    %v883 = vpack.c.b16 %v859, %v858
    %v884 = vpack.c.b16 %v861, %v860
    %v885 = vpack.c.b16 %v863, %v862
    %v886 = vpack.c.b16 %v865, %v864
    %v887 = vpack.c.b16 %v867, %v866
    %v888 = vpack.c.b16 %v869, %v868
    %v889 = vpack.c.b16 %v871, %v870
    %v890 = vpack.c.b16 %v873, %v872
    %v891 = vpack.c.b16 %v875, %v874
    %908 = vmatpush.bf16.msra.mxu0 %v883
    %909 = vmatpush.bf16.msra.mxu0 %v882
    %910 = vmatpush.bf16.msra.mxu0 %v881
    %911 = vmatpush.bf16.msra.mxu0 %v880
    %912 = vmatpush.bf16.msra.mxu0 %v879
    %913 = vmatpush.bf16.msra.mxu0 %v878
    %914 = vmatpush.bf16.msra.mxu0 %v877
    %915 = vmatpush.bf16.msra.mxu0 %v876
    %916 = vmatmul.bf16.gmra.mxu0 %v774
    %v917 = vpop.f32.mrf.mxu0
    %v918 = vadd.f32 %v810, %v917
    %v919 = vpop.f32.mrf.mxu0
    %v920 = vadd.f32 %v810, %v919
    %921 = vdwg.mxu0
    %922 = vmatpush.bf16.msra.mxu0 %v891
    %923 = vmatpush.bf16.msra.mxu0 %v890
    %924 = vmatpush.bf16.msra.mxu0 %v889
    %925 = vmatpush.bf16.msra.mxu0 %v888
    %926 = vmatpush.bf16.msra.mxu0 %v887
    %927 = vmatpush.bf16.msra.mxu0 %v886
    %928 = vmatpush.bf16.msra.mxu0 %v885
    %929 = vmatpush.bf16.msra.mxu0 %v884
    %930 = vmatmul.bf16.gmra.mxu0 %v775
    %v931 = vpop.f32.mrf.mxu0
    %v932 = vadd.f32 %v918, %v931
    %v933 = vpop.f32.mrf.mxu0
    %v934 = vadd.f32 %v920, %v933
    %935 = vdwg.mxu0
    %vm936 = vcmp.gt.f32.partialorder %v932, 0.0
    %vm937 = vcmp.gt.f32.partialorder %v934, 0.0
    %v938 = vmul.f32 %v932, 0.2
    %v939 = vmul.f32 %v934, 0.2
    %v940 = vsel %vm936, %v932, %v938
    %v941 = vsel %vm937, %v934, %v939
    %v942 = vld [vmem:[%s7] sm:$0x1]
    %v944 = vperm.slane %v942, 0
    %v946 = vmul.f32 %v940, %v944
    %v947 = vmul.f32 %v941, %v944
    %948 = vadd.xlane.f32.xlu0 %v946
    %v949 = vpop.xlane.xlu0 %948
    %950 = vadd.xlane.f32.xlu0 %v947
    %v951 = vpop.xlane.xlu0 %950
    %v952 = vld [vmem:[#allocation2] sm:$0x1]
    %v954 = vperm.slane %v952, 0
    %v956 = vadd.f32 %v949, %v954
    %v957 = vadd.f32 %v951, %v954
    %v958 = vxor.u32 %v956, 2147483648
    %v959 = vxor.u32 %v957, 2147483648
    %v960 = vmul.f32 %v958, 1.442695
    %v961 = vpow.pop %v960
    %v962 = vmul.f32 %v959, 1.442695
    %v963 = vpow.pop %v962
    %v964 = vadd.f32 %v961, 1.0
    %v965 = vadd.f32 %v963, 1.0
    %v966 = vrcp.pop %v964
    %v967 = vmul.f32 %v964, %v966
    %v968 = vsub.f32 1.0, %v967
    %v969 = vmul.f32 %v966, %v968
    %v970 = vadd.f32 %v966, %v969
    %vm971 = vweird.f32 %v964
    %vm972 = vweird.f32 %v966
    %vm973 = vmor %vm971, %vm972
    %v974 = vsel %vm973, %v966, %v970
    %v975 = vand.u32 2147483647, %v964
    %vm976 = vcmp.eq.f32.partialorder %v975, 8.507059e+37
    %v977 = vand.u32 %v964, 2147483648
    %v978 = vor.u32 1.1754944e-38, %v977
    %v979 = vsel %vm976, %v978, %v974
    %v980 = vmul.f32 1.0, %v979
    %v981 = vrcp.pop %v965
    %v982 = vmul.f32 %v965, %v981
    %v983 = vsub.f32 1.0, %v982
    %v984 = vmul.f32 %v981, %v983
    %v985 = vadd.f32 %v981, %v984
    %vm986 = vweird.f32 %v965
    %vm987 = vweird.f32 %v981
    %vm988 = vmor %vm986, %vm987
    %v989 = vsel %vm988, %v981, %v985
    %v990 = vand.u32 2147483647, %v965
    %vm991 = vcmp.eq.f32.partialorder %v990, 8.507059e+37
    %v992 = vand.u32 %v965, 2147483648
    %v993 = vor.u32 1.1754944e-38, %v992
    %v994 = vsel %vm991, %v993, %v989
    %v995 = vmul.f32 1.0, %v994
    %vm996 = vcmask 7168
    %997 = vst.msk [vmem:[%s9] sm:$0xff] %vm996, %v980
    %998 = vst.msk [vmem:[%s9 + $0x8] sm:$0xff] %vm996, %v995
    // Predicated region
    $region58: #{tpu_custom_call.1} parent=1 // pred_check
      _
    $region59: #{tpu_custom_call.1} parent=1 // pred_check_branch
      %1000 = sbr.rel (0) target = $region61
    $region60: #{tpu_custom_call.1} parent=1 // pred_region
      _
    $region61: #{tpu_custom_call.1} parent=1 // pred_fallthru
      _
    // Predicated region
    $region62: #{tpu_custom_call.1} parent=1 // pred_check
      _
    $region63: #{tpu_custom_call.1} parent=1 // pred_check_branch
      %1002 = sbr.rel (0) target = $region65
    $region64: #{tpu_custom_call.1} parent=1 // pred_region
      _
    $region65: #{tpu_custom_call.1} parent=1 // pred_fallthru
      _
    %1003 = vsyncpa [#allocation4], 1
    %1004 = vsyncpa [#allocation6], 1
    %1005 = vsyncpa [#allocation9], 1

</llo_original>
